<compile_context>
chip_gen: v7x
topology: tpu7x:2x2x1
jax: 0.10.0
libtpu: 0.0.40
codegen_flags: <defaults>
</compile_context>

<pallas_src>
import functools

import jax
import jax.numpy as jnp
from jax.experimental import pallas as pl
from jax.experimental.pallas import tpu as pltpu

_LANES = 128
_SUBLANES = 8


def _round_up(x: int, m: int) -> int:
    return ((x + m - 1) // m) * m


def _cdiv(a: int, b: int) -> int:
    return (a + b - 1) // b


@functools.lru_cache(maxsize=1)
def _vmem_budget_bytes() -> int:
    """~80% of per-core VMEM capacity (generation aware), conservative fallback."""
    try:
        cap = int(pltpu.get_tpu_info().vmem_capacity_bytes)
    except Exception:
        cap = 64 << 20  # v7x-sized fallback: safe on every generation
    return max(int(cap * 0.8), 32 << 20)


# ----------------------------------------------------------------------------
# Kernels
# ----------------------------------------------------------------------------
def _resident_kernel(inv_t_ref, x_ref, w_ref, b_ref, o_ref):
    """out_tile = (x_tile @ W + b) * inv_t.   W/b are whole-array VMEM residents.

    inv_t_ref : SMEM (1, 1)      f32
    x_ref     : VMEM (tm, F)     x.dtype   (streamed, double-buffered)
    w_ref     : VMEM (F, C_pad)  x.dtype   (resident, single buffer)
    b_ref     : VMEM (1, C_pad)  f32       (resident)
    o_ref     : VMEM (tm, C_pad) f32
    """
    logits = jnp.dot(x_ref[...], w_ref[...], preferred_element_type=jnp.float32)
    o_ref[...] = ((logits + b_ref[...]) * inv_t_ref[0, 0]).astype(o_ref.dtype)


def _ktiled_kernel(inv_t_ref, x_ref, w_ref, b_ref, o_ref, acc_ref):
    """K-tiled fallback: stream (tk, C_pad) weight tiles, accumulate in f32 VMEM.

    grid = (M tiles, K tiles); K is the reduction axis ("arbitrary").
    """
    k = pl.program_id(1)

    @pl.when(k == 0)
    def _():
        acc_ref[...] = jnp.zeros_like(acc_ref)

    acc_ref[...] += jnp.dot(x_ref[...], w_ref[...],
                            preferred_element_type=jnp.float32)

    @pl.when(k == pl.num_programs(1) - 1)
    def _():
        o_ref[...] = ((acc_ref[...] + b_ref[...]) * inv_t_ref[0, 0]).astype(o_ref.dtype)


# ----------------------------------------------------------------------------
# Static tiling plan (pure Python on shapes; runs at trace time)
# ----------------------------------------------------------------------------
def _plan(B, F, C_pad, itemsize, budget, *, force_ktiled=False, tk_cap=2048):
    slack = 2 << 20                 # compiler-internal scratch headroom
    bias_bytes = C_pad * 4
    out_row = C_pad * 4             # f32 output bytes per row
    x_row = F * itemsize            # x bytes per row

    def _batch_tiles(tm_cap):
        """Pick tm <= tm_cap; balance tiles so tail padding stays ~<= 8 rows/tile."""
        tm_cap = min(tm_cap, 1024)
        if tm_cap >= B:
            return B, 1, B          # single tile, zero batch padding
        b_pad = _round_up(B, _SUBLANES)
        grid_m = _cdiv(b_pad, tm_cap)
        tm = _round_up(_cdiv(b_pad, grid_m), _SUBLANES)   # balanced (<= tm_cap)
        return tm, grid_m, grid_m * tm

    if not force_ktiled:
        # Resident-weight path: whole W in VMEM, single-buffered.
        w_resident = F * C_pad * itemsize
        avail = budget - slack - bias_bytes - w_resident
        denom = 2 * x_row + 2 * out_row           # x + out double-buffered
        tm = (avail // denom) if avail > 0 else 0
        tm = (tm // _SUBLANES) * _SUBLANES
        if tm >= _SUBLANES:
            tm, grid_m, b_tiled = _batch_tiles(tm)
            return dict(mode="resident", tm=tm, grid_m=grid_m, b_tiled=b_tiled)

    # K-tiled fallback (weight cannot stay resident, or forced for testing).
    f_pad = _round_up(F, _LANES)
    tk = _LANES
    for cand in range(min(tk_cap, f_pad), _LANES - 1, -_LANES):
        if cand % _LANES == 0 and f_pad % cand == 0:
            tk = cand
            break
    avail = budget - slack - bias_bytes - 2 * tk * C_pad * itemsize   # W double-buffered
    denom = 2 * tk * itemsize + 3 * out_row       # x dbuf + acc + out dbuf
    tm = max(avail // denom, _SUBLANES) if avail > 0 else _SUBLANES
    tm = max((tm // _SUBLANES) * _SUBLANES, _SUBLANES)
    tm, grid_m, b_tiled = _batch_tiles(tm)
    return dict(mode="ktiled", tm=tm, grid_m=grid_m, b_tiled=b_tiled,
                tk=tk, f_pad=f_pad)


# ----------------------------------------------------------------------------
# Wrapper
# ----------------------------------------------------------------------------
@functools.partial(jax.jit, static_argnames=("force_ktiled", "tk_cap"))
def model_with_temperature_forward(x_nchw, weight, bias, temperature,
                                   *, force_ktiled=False, tk_cap=2048):
    """Fused wrapped-model + temperature-scaling forward pass.

    x_nchw      : [B, C, H, W]  (compute dtype follows x.dtype; no wrapper cast)
    weight      : [F, NUM_CLASSES]   (F = C*H*W)
    bias        : [NUM_CLASSES]
    temperature : (1,) f32
    returns     : [B, NUM_CLASSES] f32   ==  (x.flatten(1) @ W + b) / temperature
    """
    B = x_nchw.shape[0]
    F = 1
    for d in x_nchw.shape[1:]:
        F *= d
    C = weight.shape[1]

    dt = x_nchw.dtype
    itemsize = jnp.dtype(dt).itemsize
    C_pad = _round_up(max(C, _LANES), _LANES)       # lane-dense output / weight cols

    budget = _vmem_budget_bytes()
    plan = _plan(B, F, C_pad, itemsize, budget,
                 force_ktiled=force_ktiled, tk_cap=tk_cap)
    tm, grid_m, b_tiled = plan["tm"], plan["grid_m"], plan["b_tiled"]
    pad_b = b_tiled - B

    # Small operands: pad/cast (cheap — weight/bias are tiny vs. x).
    x_flat = x_nchw.reshape(B, F)
    w_cast = weight if weight.dtype == dt else weight.astype(dt)
    w_p = jnp.pad(w_cast, ((0, 0), (0, C_pad - C)))
    b_p = jnp.pad(bias.astype(jnp.float32).reshape(1, C), ((0, 0), (0, C_pad - C)))
    inv_t = (1.0 / temperature.astype(jnp.float32)).reshape(1, 1)   # hoisted reciprocal

    smem_spec = pl.BlockSpec(memory_space=pltpu.MemorySpace.SMEM)
    vmem_whole = pl.BlockSpec(memory_space=pltpu.MemorySpace.VMEM)

    if plan["mode"] == "resident":
        # x untouched along F; pad batch only if tiling requires it (often 0).
        x_in = jnp.pad(x_flat, ((0, pad_b), (0, 0))) if pad_b else x_flat
        out = pl.pallas_call(
            _resident_kernel,
            out_shape=jax.ShapeDtypeStruct((b_tiled, C_pad), jnp.float32),
            grid=(grid_m,),
            in_specs=[
                smem_spec,                                       # 1/temperature
                pl.BlockSpec((tm, F), lambda i: (i, 0)),         # x tile (full F, no pad)
                vmem_whole,                                      # W resident, single buffer
                vmem_whole,                                      # bias resident
            ],
            out_specs=pl.BlockSpec((tm, C_pad), lambda i: (i, 0)),
            compiler_params=pltpu.CompilerParams(
                dimension_semantics=("parallel",),               # 2-TC sharding on v7x
                vmem_limit_bytes=budget,
            ),
            cost_estimate=pl.CostEstimate(
                flops=2 * b_tiled * F * C_pad,
                transcendentals=0,
                bytes_accessed=(b_tiled * F + F * C_pad) * itemsize
                + (b_tiled * C_pad + C_pad + 1) * 4,
            ),
        )(inv_t, x_in, w_p, b_p)
    else:
        tk, f_pad = plan["tk"], plan["f_pad"]
        pad_f = f_pad - F
        # F is padded only on this fallback path (weight not resident) and only
        # when F is not already lane-aligned; zero columns contribute exactly 0.
        x_in = jnp.pad(x_flat, ((0, pad_b), (0, pad_f))) if (pad_b or pad_f) else x_flat
        if pad_f:
            w_p = jnp.pad(w_p, ((0, pad_f), (0, 0)))
        grid_k = f_pad // tk
        out = pl.pallas_call(
            _ktiled_kernel,
            out_shape=jax.ShapeDtypeStruct((b_tiled, C_pad), jnp.float32),
            grid=(grid_m, grid_k),
            in_specs=[
                smem_spec,                                        # 1/temperature
                pl.BlockSpec((tm, tk), lambda i, k: (i, k)),      # x tile
                pl.BlockSpec((tk, C_pad), lambda i, k: (k, 0)),   # streamed W tile
                vmem_whole,                                       # bias resident
            ],
            out_specs=pl.BlockSpec((tm, C_pad), lambda i, k: (i, 0)),
            scratch_shapes=[pltpu.VMEM((tm, C_pad), jnp.float32)],
            compiler_params=pltpu.CompilerParams(
                dimension_semantics=("parallel", "arbitrary"),
                vmem_limit_bytes=budget,
            ),
            cost_estimate=pl.CostEstimate(
                flops=2 * b_tiled * f_pad * C_pad,
                transcendentals=0,
                bytes_accessed=(b_tiled * f_pad + f_pad * C_pad) * itemsize
                + (b_tiled * C_pad + C_pad + 1) * 4,
            ),
        )(inv_t, x_in, w_p, b_p)

    # Tiny slice back to logical logits. Downstream consumers that tolerate the
    # lane-padded [B, C_pad] buffer can skip this.
    return out[:B, :C]


if __name__ == "__main__":
    # Small shapes consistent with a classification forward pass.
    B, Cin, H, W = 2, 4, 16, 16
    NUM_CLASSES = 10
    F = Cin * H * W

    key = jax.random.PRNGKey(0)
    kx, kw, kb = jax.random.split(key, 3)

    x = jax.random.normal(kx, (B, Cin, H, W), dtype=jnp.float32)
    # Deterministic parameter init for the wrapped linear "model".
    weight = jax.random.normal(kw, (F, NUM_CLASSES), dtype=jnp.float32) * 0.02
    bias = jax.random.normal(kb, (NUM_CLASSES,), dtype=jnp.float32) * 0.01
    # nn.Parameter(torch.ones(1) * 1.5)
    temperature = jnp.ones((1,), dtype=jnp.float32) * 1.5

    # Pure-JAX reference of the fused kernel semantics.
    ref = (x.reshape(B, F) @ weight + bias) / temperature[0]

    # Default (resident-weight) path.
    out = model_with_temperature_forward(x, weight, bias, temperature)
    out = jax.block_until_ready(out)
    assert out.shape == (B, NUM_CLASSES)
    assert jnp.allclose(out, ref, atol=1e-4, rtol=1e-4), \
        float(jnp.max(jnp.abs(out - ref)))

    # Exercise the K-tiled fallback (the path taken for image-scale F / v7x).
    out_kt = model_with_temperature_forward(
        x, weight, bias, temperature, force_ktiled=True, tk_cap=256)
    out_kt = jax.block_until_ready(out_kt)
    assert out_kt.shape == (B, NUM_CLASSES)
    assert jnp.allclose(out_kt, ref, atol=1e-4, rtol=1e-4), \
        float(jnp.max(jnp.abs(out_kt - ref)))

    # TODO(synk): set_temperature() (LBFGS NLL tuning over a validation loader)
    # is an offline optimization procedure, not part of the forward pass.
    print("KERNEL_OK")
</pallas_src>

<mosaic_0001>
module attributes {stable_mosaic.version = 11 : i64} {
  func.func @_resident_kernel(%arg0: i32, %arg1: memref<1x1xf32, #tpu.memory_space<smem>>, %arg2: memref<2x1024xf32, #tpu.memory_space<vmem>>, %arg3: memref<1024x128xf32, #tpu.memory_space<vmem>>, %arg4: memref<1x128xf32, #tpu.memory_space<vmem>>, %arg5: memref<2x128xf32, #tpu.memory_space<vmem>>) attributes {dimension_semantics = [#tpu.dimension_semantics<parallel>], iteration_bounds = array<i64: 1>, scalar_prefetch = 0 : i64, scratch_operands = 0 : i64, tpu.core_type = #tpu.core_type<tc>, window_params = [{transform_indices = @transform_0, window_bounds = array<i64: 1, 1>}, {transform_indices = @transform_1, window_bounds = array<i64: 2, 1024>}, {pipeline_mode = #tpu.pipeline_mode<synchronous>, transform_indices = @transform_2, window_bounds = array<i64: 1024, 128>}, {pipeline_mode = #tpu.pipeline_mode<synchronous>, transform_indices = @transform_3, window_bounds = array<i64: 1, 128>}, {transform_indices = @transform_4, window_bounds = array<i64: 2, 128>}]} {
    %c0 = arith.constant 0 : index
    %c0_0 = arith.constant 0 : index
    %0 = vector.load %arg2[%c0, %c0_0] : memref<2x1024xf32, #tpu.memory_space<vmem>>, vector<2x1024xf32>
    %c0_1 = arith.constant 0 : index
    %c0_2 = arith.constant 0 : index
    %1 = vector.load %arg3[%c0_1, %c0_2] : memref<1024x128xf32, #tpu.memory_space<vmem>>, vector<1024x128xf32>
    %cst = arith.constant dense<0.000000e+00> : vector<2x128xf32>
    %2 = tpu.matmul %0, %1, %cst {dimension_numbers = #tpu.dot_dimension_numbers<[1], [0], [0], [1], [0, 0, 1, 1], [], []>} : vector<2x1024xf32>, vector<1024x128xf32>, vector<2x128xf32> -> vector<2x128xf32>
    %c0_3 = arith.constant 0 : index
    %c0_4 = arith.constant 0 : index
    %3 = vector.load %arg4[%c0_3, %c0_4] : memref<1x128xf32, #tpu.memory_space<vmem>>, vector<1x128xf32>
    %4 = vector.broadcast %3 : vector<1x128xf32> to vector<2x128xf32>
    %5 = arith.addf %2, %4 : vector<2x128xf32>
    %c0_5 = arith.constant 0 : index
    %c0_6 = arith.constant 0 : index
    %6 = memref.load %arg1[%c0_5, %c0_6] : memref<1x1xf32, #tpu.memory_space<smem>>
    %7 = vector.broadcast %6 : f32 to vector<2x128xf32>
    %8 = arith.mulf %5, %7 : vector<2x128xf32>
    %c0_7 = arith.constant 0 : index
    %c0_8 = arith.constant 0 : index
    %9 = vector.load %arg5[%c0_7, %c0_8] : memref<2x128xf32, #tpu.memory_space<vmem>>, vector<2x128xf32>
    tpu.vector_store %arg5[%c0_7, %c0_8], %8 {strides = array<i32>} : memref<2x128xf32, #tpu.memory_space<vmem>>, vector<2x128xf32>,
    return
  }
  func.func @transform_0(%arg0: i32) -> (i32, i32) {
    %c0_i32 = arith.constant 0 : i32
    %c0_i32_0 = arith.constant 0 : i32
    %c0_i32_1 = arith.constant 0 : i32
    return %c0_i32, %c0_i32_0 : i32, i32
  }
  func.func @transform_1(%arg0: i32) -> (i32, i32) {
    %c0_i32 = arith.constant 0 : i32
    %c0_i32_0 = arith.constant 0 : i32
    return %arg0, %c0_i32 : i32, i32
  }
  func.func @transform_2(%arg0: i32) -> (i32, i32) {
    %c0_i32 = arith.constant 0 : i32
    %c0_i32_0 = arith.constant 0 : i32
    %c0_i32_1 = arith.constant 0 : i32
    return %c0_i32, %c0_i32_0 : i32, i32
  }
  func.func @transform_3(%arg0: i32) -> (i32, i32) {
    %c0_i32 = arith.constant 0 : i32
    %c0_i32_0 = arith.constant 0 : i32
    %c0_i32_1 = arith.constant 0 : i32
    return %c0_i32, %c0_i32_0 : i32, i32
  }
  func.func @transform_4(%arg0: i32) -> (i32, i32) {
    %c0_i32 = arith.constant 0 : i32
    %c0_i32_0 = arith.constant 0 : i32
    return %arg0, %c0_i32 : i32, i32
  }
}

</mosaic_0001>

<llo_original>
// kernel: model_with_temperature_forward.1
$region0: #{model_with_temperature_forward.1}
  #allocation0 [shape = 'u32[]', space=smem, size = 0x4, offset = 0x4, fixed_abs, tag = 'smem constant byte address 0x4 - core index']
  #allocation1 [shape = 'u32[144,128]{1,0:T(1,128)}', space=vmem, size = 0x12000, scoped, tag = 'internal scratch']
  #allocation2 [shape = 'f32[1,1]{1,0:T(1,128)S(6)}', space=smem, size = 0x200, scoped, tag = 'scoped memory for model_with_temperature_forward.1']
  %s0 = inlined_call_operand.<no memory space> [shape: f32[1,1], index: 0, kind: input, shape index: {}]
  %s1 = inlined_call_operand.vmem [shape: f32[2,1024], index: 1, kind: input, shape index: {}]
  %s2 = inlined_call_operand.vmem [shape: f32[1024,128], index: 2, kind: input, shape index: {}]
  %s3 = inlined_call_operand.vmem [shape: f32[1,128], index: 3, kind: input, shape index: {}]
  %s4 = inlined_call_operand.hbm [shape: f32[2,128], index: 4, kind: output, shape index: {}]
  %s5 = sld [smem:[#allocation0]]
  $region26: #{model_with_temperature_forward.1} parent=0
    _
  %s7 = ssub.s32 1, %s5
  %s8 = scalar_select 0, %s7, %s5
  %9 = sst [smem:[#allocation2]] %s0
  $region1: #{model_with_temperature_forward.1} parent=0
    #allocation3 [shape = 'u8[1024]{0}', space=vmem, size = 0x400, scoped, tag = 'output window, operand 0, single buffered']
    #allocation4 [shape = 's32[1]{0}', space=sflag, size = 0x4, scoped, tag = 'scoped memory for model_with_temperature_forward.1']
    %10 = vsyncpa [#allocation4], 0
    // Predicated region
    $region2: #{model_with_temperature_forward.1} parent=1 // pred_check
      _
    $region3: #{model_with_temperature_forward.1} parent=1 // pred_check_branch
      %12 = sbr.rel (0) target = $region5
    $region4: #{model_with_temperature_forward.1} parent=1 // pred_region
      _
    $region5: #{model_with_temperature_forward.1} parent=1 // pred_fallthru
      _
    // Predicated region
    $region6: #{model_with_temperature_forward.1} parent=1 // pred_check
      _
    $region7: #{model_with_temperature_forward.1} parent=1 // pred_check_branch
      %14 = sbr.rel (0) target = $region9
    $region8: #{model_with_temperature_forward.1} parent=1 // pred_region
      _
    $region9: #{model_with_temperature_forward.1} parent=1 // pred_fallthru
      _
    // Predicated region
    $region10: #{model_with_temperature_forward.1} parent=1 // pred_check
      _
    $region11: #{model_with_temperature_forward.1} parent=1 // pred_check_branch
      %16 = sbr.rel (0) target = $region13
    $region12: #{model_with_temperature_forward.1} parent=1 // pred_region
      _
    $region13: #{model_with_temperature_forward.1} parent=1 // pred_fallthru
      _
    // Predicated region
    $region14: #{model_with_temperature_forward.1} parent=1 // pred_check
      _
    $region15: #{model_with_temperature_forward.1} parent=1 // pred_check_branch
      %18 = sbr.rel (0) target = $region17
    $region16: #{model_with_temperature_forward.1} parent=1 // pred_region
      _
    $region17: #{model_with_temperature_forward.1} parent=1 // pred_fallthru
      _
    %v19 = vld [vmem:[%s1] sm:$0xff]
    %v20 = vld [vmem:[%s1 + $0x8] sm:$0xff]
    %v21 = vld [vmem:[%s2] sm:$0xff]
    %v22 = vld [vmem:[%s2 + $0x8] sm:$0xff]
    %v23 = vld [vmem:[%s2 + $0x10] sm:$0xff]
    %v24 = vld [vmem:[%s2 + $0x18] sm:$0xff]
    %v25 = vld [vmem:[%s2 + $0x20] sm:$0xff]
    %v26 = vld [vmem:[%s2 + $0x28] sm:$0xff]
    %v27 = vld [vmem:[%s2 + $0x30] sm:$0xff]
    %v28 = vld [vmem:[%s2 + $0x38] sm:$0xff]
    %v29 = vld [vmem:[%s2 + $0x40] sm:$0xff]
    %v30 = vld [vmem:[%s2 + $0x48] sm:$0xff]
    %v31 = vld [vmem:[%s2 + $0x50] sm:$0xff]
    %v32 = vld [vmem:[%s2 + $0x58] sm:$0xff]
    %v33 = vld [vmem:[%s2 + $0x60] sm:$0xff]
    %v34 = vld [vmem:[%s2 + $0x68] sm:$0xff]
    %v35 = vld [vmem:[%s2 + $0x70] sm:$0xff]
    %v36 = vld [vmem:[%s2 + $0x78] sm:$0xff]
    %v37 = vld [vmem:[%s2 + $0x80] sm:$0xff]
    %v38 = vld [vmem:[%s2 + $0x88] sm:$0xff]
    %v39 = vld [vmem:[%s2 + $0x90] sm:$0xff]
    %v40 = vld [vmem:[%s2 + $0x98] sm:$0xff]
    %v41 = vld [vmem:[%s2 + $0xa0] sm:$0xff]
    %v42 = vld [vmem:[%s2 + $0xa8] sm:$0xff]
    %v43 = vld [vmem:[%s2 + $0xb0] sm:$0xff]
    %v44 = vld [vmem:[%s2 + $0xb8] sm:$0xff]
    %v45 = vld [vmem:[%s2 + $0xc0] sm:$0xff]
    %v46 = vld [vmem:[%s2 + $0xc8] sm:$0xff]
    %v47 = vld [vmem:[%s2 + $0xd0] sm:$0xff]
    %v48 = vld [vmem:[%s2 + $0xd8] sm:$0xff]
    %v49 = vld [vmem:[%s2 + $0xe0] sm:$0xff]
    %v50 = vld [vmem:[%s2 + $0xe8] sm:$0xff]
    %v51 = vld [vmem:[%s2 + $0xf0] sm:$0xff]
    %v52 = vld [vmem:[%s2 + $0xf8] sm:$0xff]
    %v53 = vld [vmem:[%s2 + $0x100] sm:$0xff]
    %v54 = vld [vmem:[%s2 + $0x108] sm:$0xff]
    %v55 = vld [vmem:[%s2 + $0x110] sm:$0xff]
    %v56 = vld [vmem:[%s2 + $0x118] sm:$0xff]
    %v57 = vld [vmem:[%s2 + $0x120] sm:$0xff]
    %v58 = vld [vmem:[%s2 + $0x128] sm:$0xff]
    %v59 = vld [vmem:[%s2 + $0x130] sm:$0xff]
    %v60 = vld [vmem:[%s2 + $0x138] sm:$0xff]
    %v61 = vld [vmem:[%s2 + $0x140] sm:$0xff]
    %v62 = vld [vmem:[%s2 + $0x148] sm:$0xff]
    %v63 = vld [vmem:[%s2 + $0x150] sm:$0xff]
    %v64 = vld [vmem:[%s2 + $0x158] sm:$0xff]
    %v65 = vld [vmem:[%s2 + $0x160] sm:$0xff]
    %v66 = vld [vmem:[%s2 + $0x168] sm:$0xff]
    %v67 = vld [vmem:[%s2 + $0x170] sm:$0xff]
    %v68 = vld [vmem:[%s2 + $0x178] sm:$0xff]
    %v69 = vld [vmem:[%s2 + $0x180] sm:$0xff]
    %v70 = vld [vmem:[%s2 + $0x188] sm:$0xff]
    %v71 = vld [vmem:[%s2 + $0x190] sm:$0xff]
    %v72 = vld [vmem:[%s2 + $0x198] sm:$0xff]
    %v73 = vld [vmem:[%s2 + $0x1a0] sm:$0xff]
    %v74 = vld [vmem:[%s2 + $0x1a8] sm:$0xff]
    %v75 = vld [vmem:[%s2 + $0x1b0] sm:$0xff]
    %v76 = vld [vmem:[%s2 + $0x1b8] sm:$0xff]
    %v77 = vld [vmem:[%s2 + $0x1c0] sm:$0xff]
    %v78 = vld [vmem:[%s2 + $0x1c8] sm:$0xff]
    %v79 = vld [vmem:[%s2 + $0x1d0] sm:$0xff]
    %v80 = vld [vmem:[%s2 + $0x1d8] sm:$0xff]
    %v81 = vld [vmem:[%s2 + $0x1e0] sm:$0xff]
    %v82 = vld [vmem:[%s2 + $0x1e8] sm:$0xff]
    %v83 = vld [vmem:[%s2 + $0x1f0] sm:$0xff]
    %v84 = vld [vmem:[%s2 + $0x1f8] sm:$0xff]
    %v85 = vld [vmem:[%s2 + $0x200] sm:$0xff]
    %v86 = vld [vmem:[%s2 + $0x208] sm:$0xff]
    %v87 = vld [vmem:[%s2 + $0x210] sm:$0xff]
    %v88 = vld [vmem:[%s2 + $0x218] sm:$0xff]
    %v89 = vld [vmem:[%s2 + $0x220] sm:$0xff]
    %v90 = vld [vmem:[%s2 + $0x228] sm:$0xff]
    %v91 = vld [vmem:[%s2 + $0x230] sm:$0xff]
    %v92 = vld [vmem:[%s2 + $0x238] sm:$0xff]
    %v93 = vld [vmem:[%s2 + $0x240] sm:$0xff]
    %v94 = vld [vmem:[%s2 + $0x248] sm:$0xff]
    %v95 = vld [vmem:[%s2 + $0x250] sm:$0xff]
    %v96 = vld [vmem:[%s2 + $0x258] sm:$0xff]
    %v97 = vld [vmem:[%s2 + $0x260] sm:$0xff]
    %v98 = vld [vmem:[%s2 + $0x268] sm:$0xff]
    %v99 = vld [vmem:[%s2 + $0x270] sm:$0xff]
    %v100 = vld [vmem:[%s2 + $0x278] sm:$0xff]
    %v101 = vld [vmem:[%s2 + $0x280] sm:$0xff]
    %v102 = vld [vmem:[%s2 + $0x288] sm:$0xff]
    %v103 = vld [vmem:[%s2 + $0x290] sm:$0xff]
    %v104 = vld [vmem:[%s2 + $0x298] sm:$0xff]
    %v105 = vld [vmem:[%s2 + $0x2a0] sm:$0xff]
    %v106 = vld [vmem:[%s2 + $0x2a8] sm:$0xff]
    %v107 = vld [vmem:[%s2 + $0x2b0] sm:$0xff]
    %v108 = vld [vmem:[%s2 + $0x2b8] sm:$0xff]
    %v109 = vld [vmem:[%s2 + $0x2c0] sm:$0xff]
    %v110 = vld [vmem:[%s2 + $0x2c8] sm:$0xff]
    %v111 = vld [vmem:[%s2 + $0x2d0] sm:$0xff]
    %v112 = vld [vmem:[%s2 + $0x2d8] sm:$0xff]
    %v113 = vld [vmem:[%s2 + $0x2e0] sm:$0xff]
    %v114 = vld [vmem:[%s2 + $0x2e8] sm:$0xff]
    %v115 = vld [vmem:[%s2 + $0x2f0] sm:$0xff]
    %v116 = vld [vmem:[%s2 + $0x2f8] sm:$0xff]
    %v117 = vld [vmem:[%s2 + $0x300] sm:$0xff]
    %v118 = vld [vmem:[%s2 + $0x308] sm:$0xff]
    %v119 = vld [vmem:[%s2 + $0x310] sm:$0xff]
    %v120 = vld [vmem:[%s2 + $0x318] sm:$0xff]
    %v121 = vld [vmem:[%s2 + $0x320] sm:$0xff]
    %v122 = vld [vmem:[%s2 + $0x328] sm:$0xff]
    %v123 = vld [vmem:[%s2 + $0x330] sm:$0xff]
    %v124 = vld [vmem:[%s2 + $0x338] sm:$0xff]
    %v125 = vld [vmem:[%s2 + $0x340] sm:$0xff]
    %v126 = vld [vmem:[%s2 + $0x348] sm:$0xff]
    %v127 = vld [vmem:[%s2 + $0x350] sm:$0xff]
    %v128 = vld [vmem:[%s2 + $0x358] sm:$0xff]
    %v129 = vld [vmem:[%s2 + $0x360] sm:$0xff]
    %v130 = vld [vmem:[%s2 + $0x368] sm:$0xff]
    %v131 = vld [vmem:[%s2 + $0x370] sm:$0xff]
    %v132 = vld [vmem:[%s2 + $0x378] sm:$0xff]
    %v133 = vld [vmem:[%s2 + $0x380] sm:$0xff]
    %v134 = vld [vmem:[%s2 + $0x388] sm:$0xff]
    %v135 = vld [vmem:[%s2 + $0x390] sm:$0xff]
    %v136 = vld [vmem:[%s2 + $0x398] sm:$0xff]
    %v137 = vld [vmem:[%s2 + $0x3a0] sm:$0xff]
    %v138 = vld [vmem:[%s2 + $0x3a8] sm:$0xff]
    %v139 = vld [vmem:[%s2 + $0x3b0] sm:$0xff]
    %v140 = vld [vmem:[%s2 + $0x3b8] sm:$0xff]
    %v141 = vld [vmem:[%s2 + $0x3c0] sm:$0xff]
    %v142 = vld [vmem:[%s2 + $0x3c8] sm:$0xff]
    %v143 = vld [vmem:[%s2 + $0x3d0] sm:$0xff]
    %v144 = vld [vmem:[%s2 + $0x3d8] sm:$0xff]
    %v145 = vld [vmem:[%s2 + $0x3e0] sm:$0xff]
    %v146 = vld [vmem:[%s2 + $0x3e8] sm:$0xff]
    %v147 = vld [vmem:[%s2 + $0x3f0] sm:$0xff]
    %v148 = vld [vmem:[%s2 + $0x3f8] sm:$0xff]
    %v149 = vld [vmem:[%s3] sm:$0x1]
    %v151 = vlaneseq
    %v152 = vshrl.u32 %v151, 7
    %v153 = vsub.s32 0, %v152
    %v154 = vrot.slane %v149, %v153
    %v158 = vcombine.high %v19, %v19
    %v160 = vunpack.c.l.s4 1983009808
    %v161 = vunpack.c.0.s8 %v160
    %v162 = vlaneseq
    %v163 = vshrl.u32 %v162, 7
    %v164 = vsub.s32 %v161, %v163
    %v165 = vrot.slane %v19, %v164
    %v167 = vunpack.c.l.s4 1983009808
    %v168 = vunpack.c.0.s8 %v167
    %v169 = vlaneseq
    %v170 = vshrl.u32 %v169, 7
    %v171 = vsub.s32 %v168, %v170
    %v172 = vrot.slane %v158, %v171
    %v173 = vcombine.high %v165, %v165
    %v174 = vcombine.high %v172, %v172
    %v175 = vcombine.high %v20, %v20
    %v177 = vunpack.c.l.s4 1983009808
    %v178 = vunpack.c.0.s8 %v177
    %v179 = vlaneseq
    %v180 = vshrl.u32 %v179, 7
    %v181 = vsub.s32 %v178, %v180
    %v182 = vrot.slane %v20, %v181
    %v184 = vunpack.c.l.s4 1983009808
    %v185 = vunpack.c.0.s8 %v184
    %v186 = vlaneseq
    %v187 = vshrl.u32 %v186, 7
    %v188 = vsub.s32 %v185, %v187
    %v189 = vrot.slane %v175, %v188
    %v190 = vcombine.high %v182, %v182
    %v191 = vcombine.high %v189, %v189
    %200 = vmatprep.subr.mxu0 0.0
    %201 = vmatpush1.msra.mxu0 %v21
    %202 = vmatprep.subr.mxu0 0.0
    %203 = vmatpush1.msra.mxu0 %v22
    %204 = vmatprep.subr.mxu0 0.0
    %205 = vmatpush1.msra.mxu0 %v23
    %206 = vmatprep.subr.mxu0 0.0
    %207 = vmatpush1.msra.mxu0 %v24
    %208 = vmatprep.subr.mxu0 0.0
    %209 = vmatpush1.msra.mxu0 %v25
    %210 = vmatprep.subr.mxu0 0.0
    %211 = vmatpush1.msra.mxu0 %v26
    %212 = vmatprep.subr.mxu0 0.0
    %213 = vmatpush1.msra.mxu0 %v27
    %214 = vmatprep.subr.mxu0 0.0
    %215 = vmatpush1.msra.mxu0 %v28
    %216 = vmatprep.subr.mxu0 0.0
    %217 = vmatpush1.msra.mxu0 %v29
    %218 = vmatprep.subr.mxu0 0.0
    %219 = vmatpush1.msra.mxu0 %v30
    %220 = vmatprep.subr.mxu0 0.0
    %221 = vmatpush1.msra.mxu0 %v31
    %222 = vmatprep.subr.mxu0 0.0
    %223 = vmatpush1.msra.mxu0 %v32
    %224 = vmatprep.subr.mxu0 0.0
    %225 = vmatpush1.msra.mxu0 %v33
    %226 = vmatprep.subr.mxu0 0.0
    %227 = vmatpush1.msra.mxu0 %v34
    %228 = vmatprep.subr.mxu0 0.0
    %229 = vmatpush1.msra.mxu0 %v35
    %230 = vmatprep.subr.mxu0 0.0
    %231 = vmatpush1.msra.mxu0 %v36
    %232 = vmatprep.subr.mxu0 0.0
    %233 = vmatpush1.msra.mxu0 %v37
    %234 = vmatprep.subr.mxu0 0.0
    %235 = vmatpush1.msra.mxu0 %v38
    %236 = vmatprep.subr.mxu0 0.0
    %237 = vmatpush1.msra.mxu0 %v39
    %238 = vmatprep.subr.mxu0 0.0
    %239 = vmatpush1.msra.mxu0 %v40
    %240 = vmatprep.subr.mxu0 0.0
    %241 = vmatpush1.msra.mxu0 %v41
    %242 = vmatprep.subr.mxu0 0.0
    %243 = vmatpush1.msra.mxu0 %v42
    %244 = vmatprep.subr.mxu0 0.0
    %245 = vmatpush1.msra.mxu0 %v43
    %246 = vmatprep.subr.mxu0 0.0
    %247 = vmatpush1.msra.mxu0 %v44
    %248 = vmatprep.subr.mxu0 0.0
    %249 = vmatpush1.msra.mxu0 %v45
    %250 = vmatprep.subr.mxu0 0.0
    %251 = vmatpush1.msra.mxu0 %v46
    %252 = vmatprep.subr.mxu0 0.0
    %253 = vmatpush1.msra.mxu0 %v47
    %254 = vmatprep.subr.mxu0 0.0
    %255 = vmatpush1.msra.mxu0 %v48
    %256 = vmatprep.subr.mxu0 0.0
    %257 = vmatpush1.msra.mxu0 %v49
    %258 = vmatprep.subr.mxu0 0.0
    %259 = vmatpush1.msra.mxu0 %v50
    %260 = vmatprep.subr.mxu0 0.0
    %261 = vmatpush1.msra.mxu0 %v51
    %262 = vmatprep.subr.mxu0 0.0
    %263 = vmatpush1.msra.mxu0 %v52
    %264 = vmatprep.mubr.f32.mxu0 %v173
    %265 = vmatmul.mubr.f32.gmra.mrb[0].mxu0 %v165
    %v266 = vpop.f32.mrb[0].mxu0
    %v267 = vadd.f32 %v154, %v266
    %v268 = vpop.f32.mrb[0].mxu0
    %269 = vdwg.mxu0
    %270 = vmatprep.subr.mxu0 0.0
    %271 = vmatpush1.msra.mxu0 %v53
    %272 = vmatprep.subr.mxu0 0.0
    %273 = vmatpush1.msra.mxu0 %v54
    %274 = vmatprep.subr.mxu0 0.0
    %275 = vmatpush1.msra.mxu0 %v55
    %276 = vmatprep.subr.mxu0 0.0
    %277 = vmatpush1.msra.mxu0 %v56
    %278 = vmatprep.subr.mxu0 0.0
    %279 = vmatpush1.msra.mxu0 %v57
    %280 = vmatprep.subr.mxu0 0.0
    %281 = vmatpush1.msra.mxu0 %v58
    %282 = vmatprep.subr.mxu0 0.0
    %283 = vmatpush1.msra.mxu0 %v59
    %284 = vmatprep.subr.mxu0 0.0
    %285 = vmatpush1.msra.mxu0 %v60
    %286 = vmatprep.subr.mxu0 0.0
    %287 = vmatpush1.msra.mxu0 %v61
    %288 = vmatprep.subr.mxu0 0.0
    %289 = vmatpush1.msra.mxu0 %v62
    %290 = vmatprep.subr.mxu0 0.0
    %291 = vmatpush1.msra.mxu0 %v63
    %292 = vmatprep.subr.mxu0 0.0
    %293 = vmatpush1.msra.mxu0 %v64
    %294 = vmatprep.subr.mxu0 0.0
    %295 = vmatpush1.msra.mxu0 %v65
    %296 = vmatprep.subr.mxu0 0.0
    %297 = vmatpush1.msra.mxu0 %v66
    %298 = vmatprep.subr.mxu0 0.0
    %299 = vmatpush1.msra.mxu0 %v67
    %300 = vmatprep.subr.mxu0 0.0
    %301 = vmatpush1.msra.mxu0 %v68
    %302 = vmatprep.subr.mxu0 0.0
    %303 = vmatpush1.msra.mxu0 %v69
    %304 = vmatprep.subr.mxu0 0.0
    %305 = vmatpush1.msra.mxu0 %v70
    %306 = vmatprep.subr.mxu0 0.0
    %307 = vmatpush1.msra.mxu0 %v71
    %308 = vmatprep.subr.mxu0 0.0
    %309 = vmatpush1.msra.mxu0 %v72
    %310 = vmatprep.subr.mxu0 0.0
    %311 = vmatpush1.msra.mxu0 %v73
    %312 = vmatprep.subr.mxu0 0.0
    %313 = vmatpush1.msra.mxu0 %v74
    %314 = vmatprep.subr.mxu0 0.0
    %315 = vmatpush1.msra.mxu0 %v75
    %316 = vmatprep.subr.mxu0 0.0
    %317 = vmatpush1.msra.mxu0 %v76
    %318 = vmatprep.subr.mxu0 0.0
    %319 = vmatpush1.msra.mxu0 %v77
    %320 = vmatprep.subr.mxu0 0.0
    %321 = vmatpush1.msra.mxu0 %v78
    %322 = vmatprep.subr.mxu0 0.0
    %323 = vmatpush1.msra.mxu0 %v79
    %324 = vmatprep.subr.mxu0 0.0
    %325 = vmatpush1.msra.mxu0 %v80
    %326 = vmatprep.subr.mxu0 0.0
    %327 = vmatpush1.msra.mxu0 %v81
    %328 = vmatprep.subr.mxu0 0.0
    %329 = vmatpush1.msra.mxu0 %v82
    %330 = vmatprep.subr.mxu0 0.0
    %331 = vmatpush1.msra.mxu0 %v83
    %332 = vmatprep.subr.mxu0 0.0
    %333 = vmatpush1.msra.mxu0 %v84
    %334 = vmatprep.mubr.f32.mxu0 %v174
    %335 = vmatmul.mubr.f32.gmra.mrb[0].mxu0 %v172
    %v336 = vpop.f32.mrb[0].mxu0
    %v337 = vadd.f32 %v267, %v336
    %v338 = vpop.f32.mrb[0].mxu0
    %339 = vdwg.mxu0
    %340 = vmatprep.subr.mxu0 0.0
    %341 = vmatpush1.msra.mxu0 %v85
    %342 = vmatprep.subr.mxu0 0.0
    %343 = vmatpush1.msra.mxu0 %v86
    %344 = vmatprep.subr.mxu0 0.0
    %345 = vmatpush1.msra.mxu0 %v87
    %346 = vmatprep.subr.mxu0 0.0
    %347 = vmatpush1.msra.mxu0 %v88
    %348 = vmatprep.subr.mxu0 0.0
    %349 = vmatpush1.msra.mxu0 %v89
    %350 = vmatprep.subr.mxu0 0.0
    %351 = vmatpush1.msra.mxu0 %v90
    %352 = vmatprep.subr.mxu0 0.0
    %353 = vmatpush1.msra.mxu0 %v91
    %354 = vmatprep.subr.mxu0 0.0
    %355 = vmatpush1.msra.mxu0 %v92
    %356 = vmatprep.subr.mxu0 0.0
    %357 = vmatpush1.msra.mxu0 %v93
    %358 = vmatprep.subr.mxu0 0.0
    %359 = vmatpush1.msra.mxu0 %v94
    %360 = vmatprep.subr.mxu0 0.0
    %361 = vmatpush1.msra.mxu0 %v95
    %362 = vmatprep.subr.mxu0 0.0
    %363 = vmatpush1.msra.mxu0 %v96
    %364 = vmatprep.subr.mxu0 0.0
    %365 = vmatpush1.msra.mxu0 %v97
    %366 = vmatprep.subr.mxu0 0.0
    %367 = vmatpush1.msra.mxu0 %v98
    %368 = vmatprep.subr.mxu0 0.0
    %369 = vmatpush1.msra.mxu0 %v99
    %370 = vmatprep.subr.mxu0 0.0
    %371 = vmatpush1.msra.mxu0 %v100
    %372 = vmatprep.subr.mxu0 0.0
    %373 = vmatpush1.msra.mxu0 %v101
    %374 = vmatprep.subr.mxu0 0.0
    %375 = vmatpush1.msra.mxu0 %v102
    %376 = vmatprep.subr.mxu0 0.0
    %377 = vmatpush1.msra.mxu0 %v103
    %378 = vmatprep.subr.mxu0 0.0
    %379 = vmatpush1.msra.mxu0 %v104
    %380 = vmatprep.subr.mxu0 0.0
    %381 = vmatpush1.msra.mxu0 %v105
    %382 = vmatprep.subr.mxu0 0.0
    %383 = vmatpush1.msra.mxu0 %v106
    %384 = vmatprep.subr.mxu0 0.0
    %385 = vmatpush1.msra.mxu0 %v107
    %386 = vmatprep.subr.mxu0 0.0
    %387 = vmatpush1.msra.mxu0 %v108
    %388 = vmatprep.subr.mxu0 0.0
    %389 = vmatpush1.msra.mxu0 %v109
    %390 = vmatprep.subr.mxu0 0.0
    %391 = vmatpush1.msra.mxu0 %v110
    %392 = vmatprep.subr.mxu0 0.0
    %393 = vmatpush1.msra.mxu0 %v111
    %394 = vmatprep.subr.mxu0 0.0
    %395 = vmatpush1.msra.mxu0 %v112
    %396 = vmatprep.subr.mxu0 0.0
    %397 = vmatpush1.msra.mxu0 %v113
    %398 = vmatprep.subr.mxu0 0.0
    %399 = vmatpush1.msra.mxu0 %v114
    %400 = vmatprep.subr.mxu0 0.0
    %401 = vmatpush1.msra.mxu0 %v115
    %402 = vmatprep.subr.mxu0 0.0
    %403 = vmatpush1.msra.mxu0 %v116
    %404 = vmatprep.mubr.f32.mxu0 %v190
    %405 = vmatmul.mubr.f32.gmra.mrb[0].mxu0 %v182
    %v406 = vpop.f32.mrb[0].mxu0
    %v407 = vadd.f32 %v337, %v406
    %v408 = vpop.f32.mrb[0].mxu0
    %409 = vdwg.mxu0
    %410 = vmatprep.subr.mxu0 0.0
    %411 = vmatpush1.msra.mxu0 %v117
    %412 = vmatprep.subr.mxu0 0.0
    %413 = vmatpush1.msra.mxu0 %v118
    %414 = vmatprep.subr.mxu0 0.0
    %415 = vmatpush1.msra.mxu0 %v119
    %416 = vmatprep.subr.mxu0 0.0
    %417 = vmatpush1.msra.mxu0 %v120
    %418 = vmatprep.subr.mxu0 0.0
    %419 = vmatpush1.msra.mxu0 %v121
    %420 = vmatprep.subr.mxu0 0.0
    %421 = vmatpush1.msra.mxu0 %v122
    %422 = vmatprep.subr.mxu0 0.0
    %423 = vmatpush1.msra.mxu0 %v123
    %424 = vmatprep.subr.mxu0 0.0
    %425 = vmatpush1.msra.mxu0 %v124
    %426 = vmatprep.subr.mxu0 0.0
    %427 = vmatpush1.msra.mxu0 %v125
    %428 = vmatprep.subr.mxu0 0.0
    %429 = vmatpush1.msra.mxu0 %v126
    %430 = vmatprep.subr.mxu0 0.0
    %431 = vmatpush1.msra.mxu0 %v127
    %432 = vmatprep.subr.mxu0 0.0
    %433 = vmatpush1.msra.mxu0 %v128
    %434 = vmatprep.subr.mxu0 0.0
    %435 = vmatpush1.msra.mxu0 %v129
    %436 = vmatprep.subr.mxu0 0.0
    %437 = vmatpush1.msra.mxu0 %v130
    %438 = vmatprep.subr.mxu0 0.0
    %439 = vmatpush1.msra.mxu0 %v131
    %440 = vmatprep.subr.mxu0 0.0
    %441 = vmatpush1.msra.mxu0 %v132
    %442 = vmatprep.subr.mxu0 0.0
    %443 = vmatpush1.msra.mxu0 %v133
    %444 = vmatprep.subr.mxu0 0.0
    %445 = vmatpush1.msra.mxu0 %v134
    %446 = vmatprep.subr.mxu0 0.0
    %447 = vmatpush1.msra.mxu0 %v135
    %448 = vmatprep.subr.mxu0 0.0
    %449 = vmatpush1.msra.mxu0 %v136
    %450 = vmatprep.subr.mxu0 0.0
    %451 = vmatpush1.msra.mxu0 %v137
    %452 = vmatprep.subr.mxu0 0.0
    %453 = vmatpush1.msra.mxu0 %v138
    %454 = vmatprep.subr.mxu0 0.0
    %455 = vmatpush1.msra.mxu0 %v139
    %456 = vmatprep.subr.mxu0 0.0
    %457 = vmatpush1.msra.mxu0 %v140
    %458 = vmatprep.subr.mxu0 0.0
    %459 = vmatpush1.msra.mxu0 %v141
    %460 = vmatprep.subr.mxu0 0.0
    %461 = vmatpush1.msra.mxu0 %v142
    %462 = vmatprep.subr.mxu0 0.0
    %463 = vmatpush1.msra.mxu0 %v143
    %464 = vmatprep.subr.mxu0 0.0
    %465 = vmatpush1.msra.mxu0 %v144
    %466 = vmatprep.subr.mxu0 0.0
    %467 = vmatpush1.msra.mxu0 %v145
    %468 = vmatprep.subr.mxu0 0.0
    %469 = vmatpush1.msra.mxu0 %v146
    %470 = vmatprep.subr.mxu0 0.0
    %471 = vmatpush1.msra.mxu0 %v147
    %472 = vmatprep.subr.mxu0 0.0
    %473 = vmatpush1.msra.mxu0 %v148
    %474 = vmatprep.mubr.f32.mxu0 %v191
    %475 = vmatmul.mubr.f32.gmra.mrb[0].mxu0 %v189
    %v476 = vpop.f32.mrb[0].mxu0
    %v477 = vadd.f32 %v407, %v476
    %v478 = vpop.f32.mrb[0].mxu0
    %479 = vdwg.mxu0
    %s480 = sld [smem:[#allocation2]]
    %v481 = vstv %s480
    %v482 = vmul.f32 %v477, %v481
    %483 = vst [vmem:[#allocation3] sm:$0x3] %v482
    // Predicated region
    $region18: #{model_with_temperature_forward.1} parent=1 // pred_check
      _
    $region19: #{model_with_temperature_forward.1} parent=1 // pred_check_branch
      %485 = sbr.rel (0) target = $region21
    $region20: #{model_with_temperature_forward.1} parent=1 // pred_region
      %s487 = ssub.s32 32, 32
      %488 = vsyncadd [#allocation4], %s487
      %s490 = sshll.u32 [#allocation3], 4
      %s491 = int_to_ptr.vmem [resolvable:$true] %s490
      %493 = dma.vmem_to_hbm [thread:$0]  %s491, 32, %s4, [#allocation4]
    $region21: #{model_with_temperature_forward.1} parent=1 // pred_fallthru
      _
    // Predicated region
    $region22: #{model_with_temperature_forward.1} parent=1 // pred_check
      _
    $region23: #{model_with_temperature_forward.1} parent=1 // pred_check_branch
      %495 = sbr.rel (0) target = $region25
    $region24: #{model_with_temperature_forward.1} parent=1 // pred_region
      %496 = dma.done [#allocation4], 32
    $region25: #{model_with_temperature_forward.1} parent=1 // pred_fallthru
      _
    %497 = vsyncpa [#allocation4], 1

</llo_original>
